<compile_context>
chip_gen: v6e
topology: v6e:2x2x1
jax: 0.10.0
libtpu: 0.0.40
codegen_flags: <defaults>
</compile_context>

<pallas_src>
import functools

import jax
import jax.numpy as jnp
import numpy as np
from jax.experimental import pallas as pl
from jax.experimental.pallas import tpu as pltpu


# ----------------------------------------------------------------------------
# Fused kernel: LayerNorm -> FFN (Linear/ReLU/Linear) -> residual add
# ----------------------------------------------------------------------------

def _sublayer_connection_kernel(x_ref, g_ref, bln_ref,
                                w1_ref, b1_ref, w2_ref, b2_ref,
                                o_ref, *, eps, d_model):
    x = x_ref[...].astype(jnp.float32)                          # (tm, D)

    # ---- LayerNorm with exact PyTorch semantics:
    #      unbiased std (divide by D-1) and eps added to std (not variance).
    mean = jnp.mean(x, axis=-1, keepdims=True)
    xc = x - mean
    var = jnp.sum(xc * xc, axis=-1, keepdims=True) * (1.0 / float(d_model - 1))
    std = jnp.sqrt(var) + eps
    # Exact reciprocal (EUP slot ~free); fold gamma into the per-row scale.
    inv_std = pl.reciprocal(std, approx=False)                  # (tm, 1)
    scale = g_ref[...].astype(jnp.float32) * inv_std            # (tm, D)
    h = xc * scale + bln_ref[...].astype(jnp.float32)           # (tm, D)

    # ---- sublayer: position-wise FFN, entirely in VMEM.
    #      Matmul operands fed in the (bf16) weight dtype; accumulate in f32.
    wdt = w1_ref.dtype
    h1 = jnp.dot(h.astype(wdt), w1_ref[...],
                 preferred_element_type=jnp.float32)
    h1 = jnp.maximum(h1 + b1_ref[...].astype(jnp.float32), 0.0)
    y = jnp.dot(h1.astype(wdt), w2_ref[...],
                preferred_element_type=jnp.float32)
    y = y + b2_ref[...].astype(jnp.float32)

    # ---- dropout is identity in eval mode; residual add fused in-kernel.
    o_ref[...] = (x + y).astype(o_ref.dtype)


# ----------------------------------------------------------------------------
# Row-tile selection (VMEM-budget driven)
# ----------------------------------------------------------------------------

def _round_up(a, b):
    return ((a + b - 1) // b) * b


def _pick_row_tile(M, D, Dff, w_bytes, budget_bytes):
    """Largest row tile whose working set fits the VMEM budget.

    Constants (weights/biases/LN params) are single-buffered; x/out are
    double-buffered f32; intermediates h/h1/y are f32.
    Keeps the grid length >= 2 when M allows it (so both v7x TCs get tiles).
    """
    const_bytes = 2 * D * Dff * w_bytes + (3 * D + Dff) * 4
    cap = max(8, _round_up(pl.cdiv(M, 2), 8))   # prefer >= 2 grid steps
    for tm in (2048, 1024, 512, 256, 128, 64, 32, 16, 8):
        if tm > cap:
            continue
        act_bytes = 4 * tm * D * 4               # x (2 bufs) + out (2 bufs), f32
        tmp_bytes = tm * (2 * D + Dff) * 4       # h, h1, y intermediates, f32
        if const_bytes + act_bytes + tmp_bytes + (1 << 20) <= budget_bytes:
            return tm
    return 8


# ----------------------------------------------------------------------------
# Wrapper
# ----------------------------------------------------------------------------

def sublayer_connection(x, params, *, eps=1e-6, row_tile=None,
                        vmem_limit_bytes=48 << 20):
    """out = x + FFN(LayerNorm(x)).  x: (..., D); one fused pallas_call."""
    orig_shape = x.shape
    D = orig_shape[-1]
    M = int(np.prod(orig_shape[:-1]))
    Dff = params["w1"].shape[1]
    w_bytes = jnp.dtype(params["w1"].dtype).itemsize

    if row_tile is None:
        row_tile = _pick_row_tile(M, D, Dff, w_bytes,
                                  budget_bytes=(vmem_limit_bytes * 4) // 5)
    row_tile = max(8, _round_up(int(row_tile), 8))

    # Pad the flattened row axis up to a multiple of the tile (never fall back
    # to a single full-extent block); padded rows are sliced off afterwards.
    M_pad = _round_up(M, row_tile)
    x2 = x.reshape(M, D)
    if M_pad != M:
        x2 = jnp.pad(x2, ((0, M_pad - M), (0, 0)))
    grid = (M_pad // row_tile,)

    kernel = functools.partial(_sublayer_connection_kernel,
                               eps=eps, d_model=D)

    out2 = pl.pallas_call(
        kernel,
        out_shape=jax.ShapeDtypeStruct((M_pad, D), x.dtype),
        grid=grid,
        in_specs=[
            # streamed row tile of x (default double-buffered)
            pl.BlockSpec((row_tile, D), lambda i: (i, 0)),
            # constants: grid-invariant index maps -> single-buffer them
            pl.BlockSpec((1, D),   lambda i: (0, 0), pipeline_mode=pl.Buffered(1)),
            pl.BlockSpec((1, D),   lambda i: (0, 0), pipeline_mode=pl.Buffered(1)),
            pl.BlockSpec((D, Dff), lambda i: (0, 0), pipeline_mode=pl.Buffered(1)),
            pl.BlockSpec((1, Dff), lambda i: (0, 0), pipeline_mode=pl.Buffered(1)),
            pl.BlockSpec((Dff, D), lambda i: (0, 0), pipeline_mode=pl.Buffered(1)),
            pl.BlockSpec((1, D),   lambda i: (0, 0), pipeline_mode=pl.Buffered(1)),
        ],
        out_specs=pl.BlockSpec((row_tile, D), lambda i: (i, 0)),
        compiler_params=pltpu.CompilerParams(
            dimension_semantics=("parallel",),
            vmem_limit_bytes=int(vmem_limit_bytes)),
    )(x2,
      params["ln_g"].reshape(1, D), params["ln_b"].reshape(1, D),
      params["w1"], params["b1"].reshape(1, Dff),
      params["w2"], params["b2"].reshape(1, D))

    if M_pad != M:
        out2 = out2[:M]
    return out2.reshape(orig_shape)


# ----------------------------------------------------------------------------
# Pure-JAX reference (same numerics: bf16 weights / f32 accumulation)
# ----------------------------------------------------------------------------

def sublayer_connection_ref(x, params, eps=1e-6):
    D = x.shape[-1]
    x = x.astype(jnp.float32)
    mean = jnp.mean(x, axis=-1, keepdims=True)
    xc = x - mean
    var = jnp.sum(xc * xc, axis=-1, keepdims=True) / float(D - 1)
    std = jnp.sqrt(var) + eps
    h = params["ln_g"].astype(jnp.float32) * xc / std + params["ln_b"].astype(jnp.float32)
    wdt = params["w1"].dtype
    h1 = jnp.dot(h.astype(wdt), params["w1"],
                 preferred_element_type=jnp.float32) + params["b1"]
    h1 = jnp.maximum(h1, 0.0)
    y = jnp.dot(h1.astype(wdt), params["w2"],
                preferred_element_type=jnp.float32) + params["b2"]
    return x + y                                   # dropout = identity (eval)


# ----------------------------------------------------------------------------
# Deterministic parameter construction (weights stored in bf16 for the MXU)
# ----------------------------------------------------------------------------

def init_params(key, d_model=32, d_ff=64, weight_dtype=jnp.bfloat16):
    k1, k2 = jax.random.split(key)
    return dict(
        ln_g=jnp.ones((d_model,), jnp.float32),
        ln_b=jnp.zeros((d_model,), jnp.float32),
        w1=(0.1 * jax.random.normal(k1, (d_model, d_ff))).astype(weight_dtype),
        b1=jnp.zeros((d_ff,), jnp.float32),
        w2=(0.1 * jax.random.normal(k2, (d_ff, d_model))).astype(weight_dtype),
        b2=jnp.zeros((d_model,), jnp.float32),
    )


# ----------------------------------------------------------------------------

if __name__ == "__main__":
    key = jax.random.PRNGKey(0)
    B, S, D, DFF = 2, 8, 32, 64
    k_x, k_p = jax.random.split(key)

    x = jax.random.normal(k_x, (B, S, D), jnp.float32)
    params = init_params(k_p, d_model=D, d_ff=DFF)

    # Heuristic picks row_tile=8 here -> grid=(2,) "parallel" row tiles
    # (demonstrates the tiled / two-TensorCore-friendly structure at toy size).
    out = sublayer_connection(x, params)
    jax.block_until_ready(out)
    assert out.shape == (B, S, D)

    ref = sublayer_connection_ref(x, params)
    np.testing.assert_allclose(np.asarray(out), np.asarray(ref),
                               rtol=2e-3, atol=2e-3)
    print("KERNEL_OK")
</pallas_src>

<mosaic_0001>
module attributes {stable_mosaic.version = 11 : i64} {
  func.func @_sublayer_connection_kernel(%arg0: i32, %arg1: memref<8x32xf32, #tpu.memory_space<vmem>>, %arg2: memref<1x32xf32, #tpu.memory_space<vmem>>, %arg3: memref<1x32xf32, #tpu.memory_space<vmem>>, %arg4: memref<32x64xbf16, #tpu.memory_space<vmem>>, %arg5: memref<1x64xf32, #tpu.memory_space<vmem>>, %arg6: memref<64x32xbf16, #tpu.memory_space<vmem>>, %arg7: memref<1x32xf32, #tpu.memory_space<vmem>>, %arg8: memref<8x32xf32, #tpu.memory_space<vmem>>) attributes {dimension_semantics = [#tpu.dimension_semantics<parallel>], iteration_bounds = array<i64: 2>, scalar_prefetch = 0 : i64, scratch_operands = 0 : i64, tpu.core_type = #tpu.core_type<tc>, window_params = [{transform_indices = @transform_0, window_bounds = array<i64: 8, 32>}, {pipeline_mode = #tpu.pipeline_mode<synchronous>, transform_indices = @transform_1, window_bounds = array<i64: 1, 32>}, {pipeline_mode = #tpu.pipeline_mode<synchronous>, transform_indices = @transform_2, window_bounds = array<i64: 1, 32>}, {pipeline_mode = #tpu.pipeline_mode<synchronous>, transform_indices = @transform_3, window_bounds = array<i64: 32, 64>}, {pipeline_mode = #tpu.pipeline_mode<synchronous>, transform_indices = @transform_4, window_bounds = array<i64: 1, 64>}, {pipeline_mode = #tpu.pipeline_mode<synchronous>, transform_indices = @transform_5, window_bounds = array<i64: 64, 32>}, {pipeline_mode = #tpu.pipeline_mode<synchronous>, transform_indices = @transform_6, window_bounds = array<i64: 1, 32>}, {transform_indices = @transform_7, window_bounds = array<i64: 8, 32>}]} {
    %c0 = arith.constant 0 : index
    %c0_0 = arith.constant 0 : index
    %0 = vector.load %arg1[%c0, %c0_0] : memref<8x32xf32, #tpu.memory_space<vmem>>, vector<8x32xf32>
    %cst = arith.constant dense<0.000000e+00> : vector<8xf32>
    %1 = vector.multi_reduction <add>, %0, %cst [1] : vector<8x32xf32> to vector<8xf32>
    %2 = vector.shape_cast %1 : vector<8xf32> to vector<8x1xf32>
    %cst_1 = arith.constant 3.200000e+01 : f32
    %3 = vector.broadcast %cst_1 : f32 to vector<8x1xf32>
    %4 = arith.divf %2, %3 : vector<8x1xf32>
    %5 = vector.broadcast %4 : vector<8x1xf32> to vector<8x32xf32>
    %6 = arith.subf %0, %5 : vector<8x32xf32>
    %7 = arith.mulf %6, %6 : vector<8x32xf32>
    %cst_2 = arith.constant dense<0.000000e+00> : vector<8xf32>
    %8 = vector.multi_reduction <add>, %7, %cst_2 [1] : vector<8x32xf32> to vector<8xf32>
    %9 = vector.shape_cast %8 : vector<8xf32> to vector<8x1xf32>
    %cst_3 = arith.constant 0.0322580636 : f32
    %10 = vector.broadcast %cst_3 : f32 to vector<8x1xf32>
    %11 = arith.mulf %9, %10 : vector<8x1xf32>
    %12 = math.sqrt %11 : vector<8x1xf32>
    %cst_4 = arith.constant 9.99999997E-7 : f32
    %13 = vector.broadcast %cst_4 : f32 to vector<8x1xf32>
    %14 = arith.addf %12, %13 : vector<8x1xf32>
    %15 = tpu.reciprocal %14 : vector<8x1xf32> -> vector<8x1xf32>
    %c0_5 = arith.constant 0 : index
    %c0_6 = arith.constant 0 : index
    %16 = vector.load %arg2[%c0_5, %c0_6] : memref<1x32xf32, #tpu.memory_space<vmem>>, vector<1x32xf32>
    %17 = vector.broadcast %16 : vector<1x32xf32> to vector<8x32xf32>
    %18 = vector.broadcast %15 : vector<8x1xf32> to vector<8x32xf32>
    %19 = arith.mulf %17, %18 : vector<8x32xf32>
    %20 = arith.mulf %6, %19 : vector<8x32xf32>
    %c0_7 = arith.constant 0 : index
    %c0_8 = arith.constant 0 : index
    %21 = vector.load %arg3[%c0_7, %c0_8] : memref<1x32xf32, #tpu.memory_space<vmem>>, vector<1x32xf32>
    %22 = vector.broadcast %21 : vector<1x32xf32> to vector<8x32xf32>
    %23 = arith.addf %20, %22 : vector<8x32xf32>
    %24 = arith.truncf %23 : vector<8x32xf32> to vector<8x32xbf16>
    %c0_9 = arith.constant 0 : index
    %c0_10 = arith.constant 0 : index
    %25 = vector.load %arg4[%c0_9, %c0_10] : memref<32x64xbf16, #tpu.memory_space<vmem>>, vector<32x64xbf16>
    %cst_11 = arith.constant dense<0.000000e+00> : vector<8x64xf32>
    %26 = tpu.matmul %24, %25, %cst_11 {dimension_numbers = #tpu.dot_dimension_numbers<[1], [0], [0], [1], [0, 0, 1, 1], [], []>} : vector<8x32xbf16>, vector<32x64xbf16>, vector<8x64xf32> -> vector<8x64xf32>
    %c0_12 = arith.constant 0 : index
    %c0_13 = arith.constant 0 : index
    %27 = vector.load %arg5[%c0_12, %c0_13] : memref<1x64xf32, #tpu.memory_space<vmem>>, vector<1x64xf32>
    %28 = vector.broadcast %27 : vector<1x64xf32> to vector<8x64xf32>
    %29 = arith.addf %26, %28 : vector<8x64xf32>
    %cst_14 = arith.constant 0.000000e+00 : f32
    %30 = vector.broadcast %cst_14 : f32 to vector<8x64xf32>
    %31 = arith.maximumf %29, %30 : vector<8x64xf32>
    %32 = arith.truncf %31 : vector<8x64xf32> to vector<8x64xbf16>
    %c0_15 = arith.constant 0 : index
    %c0_16 = arith.constant 0 : index
    %33 = vector.load %arg6[%c0_15, %c0_16] : memref<64x32xbf16, #tpu.memory_space<vmem>>, vector<64x32xbf16>
    %cst_17 = arith.constant dense<0.000000e+00> : vector<8x32xf32>
    %34 = tpu.matmul %32, %33, %cst_17 {dimension_numbers = #tpu.dot_dimension_numbers<[1], [0], [0], [1], [0, 0, 1, 1], [], []>} : vector<8x64xbf16>, vector<64x32xbf16>, vector<8x32xf32> -> vector<8x32xf32>
    %c0_18 = arith.constant 0 : index
    %c0_19 = arith.constant 0 : index
    %35 = vector.load %arg7[%c0_18, %c0_19] : memref<1x32xf32, #tpu.memory_space<vmem>>, vector<1x32xf32>
    %36 = vector.broadcast %35 : vector<1x32xf32> to vector<8x32xf32>
    %37 = arith.addf %34, %36 : vector<8x32xf32>
    %38 = arith.addf %0, %37 : vector<8x32xf32>
    %c0_20 = arith.constant 0 : index
    %c0_21 = arith.constant 0 : index
    %39 = vector.load %arg8[%c0_20, %c0_21] : memref<8x32xf32, #tpu.memory_space<vmem>>, vector<8x32xf32>
    tpu.vector_store %arg8[%c0_20, %c0_21], %38 {strides = array<i32>} : memref<8x32xf32, #tpu.memory_space<vmem>>, vector<8x32xf32>,
    return
  }
  func.func @transform_0(%arg0: i32) -> (i32, i32) {
    %c0_i32 = arith.constant 0 : i32
    %c0_i32_0 = arith.constant 0 : i32
    return %arg0, %c0_i32 : i32, i32
  }
  func.func @transform_1(%arg0: i32) -> (i32, i32) {
    %c0_i32 = arith.constant 0 : i32
    %c0_i32_0 = arith.constant 0 : i32
    %c0_i32_1 = arith.constant 0 : i32
    return %c0_i32, %c0_i32_0 : i32, i32
  }
  func.func @transform_2(%arg0: i32) -> (i32, i32) {
    %c0_i32 = arith.constant 0 : i32
    %c0_i32_0 = arith.constant 0 : i32
    %c0_i32_1 = arith.constant 0 : i32
    return %c0_i32, %c0_i32_0 : i32, i32
  }
  func.func @transform_3(%arg0: i32) -> (i32, i32) {
    %c0_i32 = arith.constant 0 : i32
    %c0_i32_0 = arith.constant 0 : i32
    %c0_i32_1 = arith.constant 0 : i32
    return %c0_i32, %c0_i32_0 : i32, i32
  }
  func.func @transform_4(%arg0: i32) -> (i32, i32) {
    %c0_i32 = arith.constant 0 : i32
    %c0_i32_0 = arith.constant 0 : i32
    %c0_i32_1 = arith.constant 0 : i32
    return %c0_i32, %c0_i32_0 : i32, i32
  }
  func.func @transform_5(%arg0: i32) -> (i32, i32) {
    %c0_i32 = arith.constant 0 : i32
    %c0_i32_0 = arith.constant 0 : i32
    %c0_i32_1 = arith.constant 0 : i32
    return %c0_i32, %c0_i32_0 : i32, i32
  }
  func.func @transform_6(%arg0: i32) -> (i32, i32) {
    %c0_i32 = arith.constant 0 : i32
    %c0_i32_0 = arith.constant 0 : i32
    %c0_i32_1 = arith.constant 0 : i32
    return %c0_i32, %c0_i32_0 : i32, i32
  }
  func.func @transform_7(%arg0: i32) -> (i32, i32) {
    %c0_i32 = arith.constant 0 : i32
    %c0_i32_0 = arith.constant 0 : i32
    return %arg0, %c0_i32 : i32, i32
  }
}

</mosaic_0001>

<llo_original>
// kernel: tpu_custom_call.1
$region0: #{tpu_custom_call.1}
  #allocation0 [shape = 'u32[]', space=smem, size = 0x4, offset = 0x4, fixed_abs, tag = 'smem constant byte address 0x4 - core index']
  #allocation1 [shape = 'u32[144,128]{1,0:T(1,128)}', space=vmem, size = 0x12000, scoped, tag = 'internal scratch']
  %s0 = inlined_call_operand.vmem [shape: f32[16,32], index: 0, kind: input, shape index: {}]
  %s1 = inlined_call_operand.vmem [shape: f32[1,32], index: 1, kind: input, shape index: {}]
  %s2 = inlined_call_operand.vmem [shape: f32[1,32], index: 2, kind: input, shape index: {}]
  %s3 = inlined_call_operand.vmem [shape: bf16[32,64], index: 3, kind: input, shape index: {}]
  %s4 = inlined_call_operand.vmem [shape: f32[1,64], index: 4, kind: input, shape index: {}]
  %s5 = inlined_call_operand.vmem [shape: bf16[64,32], index: 5, kind: input, shape index: {}]
  %s6 = inlined_call_operand.vmem [shape: f32[1,32], index: 6, kind: input, shape index: {}]
  %s7 = inlined_call_operand.hbm [shape: f32[16,32], index: 7, kind: output, shape index: {}]
  %s8 = sld [smem:[#allocation0]]
  $region61: #{tpu_custom_call.1} parent=0
    _
  %s10 = ssub.s32 1, %s8
  %s11 = scalar_select 0, %s10, %s8
  $region1: #{tpu_custom_call.1} parent=0
    #allocation2 [shape = 'u8[8192]{0}', space=vmem, size = 0x2000, scoped, tag = 'output window, operand 0']
    #allocation3 [shape = 's32[2]{0}', space=sflag, size = 0x8, scoped, tag = 'scoped memory for tpu_custom_call.1']
    %12 = vsyncpa [#allocation3], 0
    %s13 = scalar_lea.sflag [#allocation3], 1
    %14 = vsyncpa %s13, 0
    loop: start=0, step=1, limit=4
    $region2: #{tpu_custom_call.1} parent=1 // loop_pre_header
      _
    $region3: #{tpu_custom_call.1} parent=1 // loop_header
      %s16 = sphi 0, %s20
      %p17 = scmp.ge.s32.totalorder %s16, 4
      %s26 = sphi 0, %s28
      %s29 = sphi 0, %s26
      %s30 = sphi 0, %s29
      %s46 = sphi 0, %s30
      %s50 = sphi 0, %s50
      %s52 = sphi 0, %s50
      %s53 = sphi 0, %s52
      %s67 = sphi 0, %s53
      %s71 = sphi 0, %s71
      %s73 = sphi 0, %s71
      %s74 = sphi 0, %s73
      %s88 = sphi 0, %s74
      %s92 = sphi 0, %s92
      %s94 = sphi 0, %s92
      %s95 = sphi 0, %s94
      %s109 = sphi 0, %s95
      %s113 = sphi 0, %s113
      %s115 = sphi 0, %s113
      %s116 = sphi 0, %s115
      %s130 = sphi 0, %s116
      %s134 = sphi 0, %s134
      %s136 = sphi 0, %s134
      %s137 = sphi 0, %s136
      %s151 = sphi 0, %s137
      %s155 = sphi 0, %s155
      %s157 = sphi 0, %s155
      %s158 = sphi 0, %s157
      %s172 = sphi 0, %s158
      %s178 = sphi 0, %s180
      %s181 = sphi 0, %s178
      %s182 = sphi 0, %s181
      %s198 = sphi 0, %s182
    $region4: #{tpu_custom_call.1} parent=1 // loop_header_branch
      %19 = sbr.rel (%p17) target = $region8
    $region5: #{tpu_custom_call.1} parent=1 // loop_body
      %s21 = ssub.s32 %s16, 1
      %s22 = ssub.s32 %s16, 2
      %s23 = sadd.s32 %s16, 1
      %s24 = ssub.s32 %s16, %s23
      %p25 = scmp.eq.s32.totalorder %s24, 0
      %s27 = sadd.s32 %s26, 1
      %s28 = scalar_select %p25, %s26, %s27
      %p31 = pneg %p25
      %p32 = scmp.eq.s32.totalorder %s16, 1
      %p33 = por %p31, %p32
      %p34 = scmp.ne.s32.totalorder %s26, %s29
      %p35 = scmp.eq.s32.totalorder %s16, 0
      %p36 = por %p34, %p35
      %p37 = scmp.ne.s32.totalorder %s26, %s29
      %p38 = scmp.eq.s32.totalorder %s21, 1
      %p39 = por %p37, %p38
      %p40 = scmp.ne.s32.totalorder %s29, %s30
      %p41 = scmp.eq.s32.totalorder %s21, 0
      %p42 = por %p40, %p41
      %p43 = scmp.ne.s32.totalorder %s29, %s30
      %p44 = scmp.eq.s32.totalorder %s22, 1
      %p45 = por %p43, %p44
      %p47 = scmp.ne.s32.totalorder %s30, %s46
      %p48 = scmp.eq.s32.totalorder %s22, 0
      %p49 = por %p47, %p48
      %s51 = sadd.s32 %s50, 1
      %p54 = scmp.eq.s32.totalorder %s16, 1
      %p55 = scmp.ne.s32.totalorder %s50, %s52
      %p56 = scmp.eq.s32.totalorder %s16, 0
      %p57 = por %p55, %p56
      %p58 = scmp.ne.s32.totalorder %s50, %s52
      %p59 = scmp.eq.s32.totalorder %s21, 1
      %p60 = por %p58, %p59
      %p61 = scmp.ne.s32.totalorder %s52, %s53
      %p62 = scmp.eq.s32.totalorder %s21, 0
      %p63 = por %p61, %p62
      %p64 = scmp.ne.s32.totalorder %s52, %s53
      %p65 = scmp.eq.s32.totalorder %s22, 1
      %p66 = por %p64, %p65
      %p68 = scmp.ne.s32.totalorder %s53, %s67
      %p69 = scmp.eq.s32.totalorder %s22, 0
      %p70 = por %p68, %p69
      %s72 = sadd.s32 %s71, 1
      %p75 = scmp.eq.s32.totalorder %s16, 1
      %p76 = scmp.ne.s32.totalorder %s71, %s73
      %p77 = scmp.eq.s32.totalorder %s16, 0
      %p78 = por %p76, %p77
      %p79 = scmp.ne.s32.totalorder %s71, %s73
      %p80 = scmp.eq.s32.totalorder %s21, 1
      %p81 = por %p79, %p80
      %p82 = scmp.ne.s32.totalorder %s73, %s74
      %p83 = scmp.eq.s32.totalorder %s21, 0
      %p84 = por %p82, %p83
      %p85 = scmp.ne.s32.totalorder %s73, %s74
      %p86 = scmp.eq.s32.totalorder %s22, 1
      %p87 = por %p85, %p86
      %p89 = scmp.ne.s32.totalorder %s74, %s88
      %p90 = scmp.eq.s32.totalorder %s22, 0
      %p91 = por %p89, %p90
      %s93 = sadd.s32 %s92, 1
      %p96 = scmp.eq.s32.totalorder %s16, 1
      %p97 = scmp.ne.s32.totalorder %s92, %s94
      %p98 = scmp.eq.s32.totalorder %s16, 0
      %p99 = por %p97, %p98
      %p100 = scmp.ne.s32.totalorder %s92, %s94
      %p101 = scmp.eq.s32.totalorder %s21, 1
      %p102 = por %p100, %p101
      %p103 = scmp.ne.s32.totalorder %s94, %s95
      %p104 = scmp.eq.s32.totalorder %s21, 0
      %p105 = por %p103, %p104
      %p106 = scmp.ne.s32.totalorder %s94, %s95
      %p107 = scmp.eq.s32.totalorder %s22, 1
      %p108 = por %p106, %p107
      %p110 = scmp.ne.s32.totalorder %s95, %s109
      %p111 = scmp.eq.s32.totalorder %s22, 0
      %p112 = por %p110, %p111
      %s114 = sadd.s32 %s113, 1
      %p117 = scmp.eq.s32.totalorder %s16, 1
      %p118 = scmp.ne.s32.totalorder %s113, %s115
      %p119 = scmp.eq.s32.totalorder %s16, 0
      %p120 = por %p118, %p119
      %p121 = scmp.ne.s32.totalorder %s113, %s115
      %p122 = scmp.eq.s32.totalorder %s21, 1
      %p123 = por %p121, %p122
      %p124 = scmp.ne.s32.totalorder %s115, %s116
      %p125 = scmp.eq.s32.totalorder %s21, 0
      %p126 = por %p124, %p125
      %p127 = scmp.ne.s32.totalorder %s115, %s116
      %p128 = scmp.eq.s32.totalorder %s22, 1
      %p129 = por %p127, %p128
      %p131 = scmp.ne.s32.totalorder %s116, %s130
      %p132 = scmp.eq.s32.totalorder %s22, 0
      %p133 = por %p131, %p132
      %s135 = sadd.s32 %s134, 1
      %p138 = scmp.eq.s32.totalorder %s16, 1
      %p139 = scmp.ne.s32.totalorder %s134, %s136
      %p140 = scmp.eq.s32.totalorder %s16, 0
      %p141 = por %p139, %p140
      %p142 = scmp.ne.s32.totalorder %s134, %s136
      %p143 = scmp.eq.s32.totalorder %s21, 1
      %p144 = por %p142, %p143
      %p145 = scmp.ne.s32.totalorder %s136, %s137
      %p146 = scmp.eq.s32.totalorder %s21, 0
      %p147 = por %p145, %p146
      %p148 = scmp.ne.s32.totalorder %s136, %s137
      %p149 = scmp.eq.s32.totalorder %s22, 1
      %p150 = por %p148, %p149
      %p152 = scmp.ne.s32.totalorder %s137, %s151
      %p153 = scmp.eq.s32.totalorder %s22, 0
      %p154 = por %p152, %p153
      %s156 = sadd.s32 %s155, 1
      %p159 = scmp.eq.s32.totalorder %s16, 1
      %p160 = scmp.ne.s32.totalorder %s155, %s157
      %p161 = scmp.eq.s32.totalorder %s16, 0
      %p162 = por %p160, %p161
      %p163 = scmp.ne.s32.totalorder %s155, %s157
      %p164 = scmp.eq.s32.totalorder %s21, 1
      %p165 = por %p163, %p164
      %p166 = scmp.ne.s32.totalorder %s157, %s158
      %p167 = scmp.eq.s32.totalorder %s21, 0
      %p168 = por %p166, %p167
      %p169 = scmp.ne.s32.totalorder %s157, %s158
      %p170 = scmp.eq.s32.totalorder %s22, 1
      %p171 = por %p169, %p170
      %p173 = scmp.ne.s32.totalorder %s158, %s172
      %p174 = scmp.eq.s32.totalorder %s22, 0
      %p175 = por %p173, %p174
      %s176 = ssub.s32 %s16, %s23
      %p177 = scmp.eq.s32.totalorder %s176, 0
      %s179 = sadd.s32 %s178, 1
      %s180 = scalar_select %p177, %s178, %s179
      %p183 = pneg %p177
      %p184 = scmp.eq.s32.totalorder %s16, 1
      %p185 = por %p183, %p184
      %p186 = scmp.ne.s32.totalorder %s178, %s181
      %p187 = scmp.eq.s32.totalorder %s16, 0
      %p188 = por %p186, %p187
      %p189 = scmp.ne.s32.totalorder %s178, %s181
      %p190 = scmp.eq.s32.totalorder %s21, 1
      %p191 = por %p189, %p190
      %p192 = scmp.ne.s32.totalorder %s181, %s182
      %p193 = scmp.eq.s32.totalorder %s21, 0
      %p194 = por %p192, %p193
      %p195 = scmp.ne.s32.totalorder %s181, %s182
      %p196 = scmp.eq.s32.totalorder %s22, 1
      %p197 = por %p195, %p196
      %p199 = scmp.ne.s32.totalorder %s182, %s198
      %p200 = scmp.eq.s32.totalorder %s22, 0
      %p201 = por %p199, %p200
      %p202 = scmp.le.s32.totalorder 1, %s16
      %p203 = scmp.lt.s32.totalorder %s16, 3
      %p204 = pnand %p202, %p203
      %p205 = pneg %p204
      // Predicated region
      $region9: #{tpu_custom_call.1} parent=5 // pred_check
        _
      $region10: #{tpu_custom_call.1} parent=5 // pred_check_branch
        %207 = sbr.rel (%p204) target = $region12
      $region11: #{tpu_custom_call.1} parent=5 // pred_region
        %s208 = ssub.s32 %s16, 1
        // Predicated region
        $region13: #{tpu_custom_call.1} parent=11 // pred_check
          %p209 = pneg %p63
        $region14: #{tpu_custom_call.1} parent=11 // pred_check_branch
          %211 = sbr.rel (%p209) target = $region16
        $region15: #{tpu_custom_call.1} parent=11 // pred_region
          _
        $region16: #{tpu_custom_call.1} parent=11 // pred_fallthru
          _
        // Predicated region
        $region17: #{tpu_custom_call.1} parent=11 // pred_check
          %p212 = pneg %p84
        $region18: #{tpu_custom_call.1} parent=11 // pred_check_branch
          %214 = sbr.rel (%p212) target = $region20
        $region19: #{tpu_custom_call.1} parent=11 // pred_region
          _
        $region20: #{tpu_custom_call.1} parent=11 // pred_fallthru
          _
        // Predicated region
        $region21: #{tpu_custom_call.1} parent=11 // pred_check
          %p215 = pneg %p105
        $region22: #{tpu_custom_call.1} parent=11 // pred_check_branch
          %217 = sbr.rel (%p215) target = $region24
        $region23: #{tpu_custom_call.1} parent=11 // pred_region
          _
        $region24: #{tpu_custom_call.1} parent=11 // pred_fallthru
          _
        // Predicated region
        $region25: #{tpu_custom_call.1} parent=11 // pred_check
          %p218 = pneg %p126
        $region26: #{tpu_custom_call.1} parent=11 // pred_check_branch
          %220 = sbr.rel (%p218) target = $region28
        $region27: #{tpu_custom_call.1} parent=11 // pred_region
          _
        $region28: #{tpu_custom_call.1} parent=11 // pred_fallthru
          _
        // Predicated region
        $region29: #{tpu_custom_call.1} parent=11 // pred_check
          %p221 = pneg %p147
        $region30: #{tpu_custom_call.1} parent=11 // pred_check_branch
          %223 = sbr.rel (%p221) target = $region32
        $region31: #{tpu_custom_call.1} parent=11 // pred_region
          _
        $region32: #{tpu_custom_call.1} parent=11 // pred_fallthru
          _
        // Predicated region
        $region33: #{tpu_custom_call.1} parent=11 // pred_check
          %p224 = pneg %p168
        $region34: #{tpu_custom_call.1} parent=11 // pred_check_branch
          %226 = sbr.rel (%p224) target = $region36
        $region35: #{tpu_custom_call.1} parent=11 // pred_region
          _
        $region36: #{tpu_custom_call.1} parent=11 // pred_fallthru
          _
      $region12: #{tpu_custom_call.1} parent=5 // pred_fallthru
        _
      %p227 = scmp.lt.s32.totalorder %s16, 2
      // Predicated region
      $region37: #{tpu_custom_call.1} parent=5 // pred_check
        %p228 = pneg %p227
      $region38: #{tpu_custom_call.1} parent=5 // pred_check_branch
        %230 = sbr.rel (%p228) target = $region40
      $region39: #{tpu_custom_call.1} parent=5 // pred_region
        // Predicated region
        $region41: #{tpu_custom_call.1} parent=39 // pred_check
          %p231 = pneg %p36
        $region42: #{tpu_custom_call.1} parent=39 // pred_check_branch
          %233 = sbr.rel (%p231) target = $region44
        $region43: #{tpu_custom_call.1} parent=39 // pred_region
          %p234 = scmp.lt.s32.totalorder %s16, 1
          %s235 = scalar_select %p234, %s16, 1
          %s236 = smul.addr %s235, 8
          %s237 = scalar_lea.vmem %s0, %s236
        $region44: #{tpu_custom_call.1} parent=39 // pred_fallthru
          _
      $region40: #{tpu_custom_call.1} parent=5 // pred_fallthru
        _
      %p238 = scmp.le.s32.totalorder 1, %s16
      %p239 = scmp.lt.s32.totalorder %s16, 3
      %p240 = pnand %p238, %p239
      %p241 = pneg %p240
      // Predicated region
      $region45: #{tpu_custom_call.1} parent=5 // pred_check
        _
      $region46: #{tpu_custom_call.1} parent=5 // pred_check_branch
        %243 = sbr.rel (%p240) target = $region48
      $region47: #{tpu_custom_call.1} parent=5 // pred_region
        %s244 = ssub.s32 %s16, 1
        %p245 = scmp.lt.s32.totalorder %s21, 1
        %s246 = scalar_select %p245, %s21, 1
        %s247 = smul.addr %s246, 8
        %s248 = scalar_lea.vmem %s0, %s247
        %p249 = pneg %p42
        %p250 = pneg %p39
        %p251 = pneg %p63
        %p252 = pneg %p60
        %p253 = pneg %p84
        %p254 = pneg %p81
        %p255 = pneg %p105
        %p256 = pneg %p102
        %p257 = pneg %p126
        %p258 = pneg %p123
        %p259 = pneg %p147
        %p260 = pneg %p144
        %p261 = pneg %p168
        %p262 = pneg %p165
        %p263 = pneg %p194
        %p264 = pneg %p191
        %s265 = sand.u32 %s181, 1
        %s266 = scalar_lea.sflag [#allocation3], %s265
        %s267 = sand.u32 %s181, 1
        %s268 = smul.addr %s267, 8
        %s269 = scalar_lea.vmem [#allocation2], %s268
        %p270 = scmp.lt.s32.totalorder %s21, 1
        %s271 = scalar_select %p270, %s21, 1
        %s272 = smul.addr %s271, 8
        %s273 = scalar_lea.vmem %s0, %s272
        %v275 = vld [vmem:[%s273] sm:$0xff]
        %vm276 = vcmask 261120
        %v277 = vsel %vm276, %v275, 0.0
        %278 = vadd.xlane.f32.xlu0 %v277
        %v279 = vpop.xlane.xlu0 %278
        %v280 = vrcp.pop 32.0
        %v281 = vmul.f32 %v279, %v280
        %v282 = vsub.f32 %v275, %v281
        %v283 = vmul.f32 %v282, %v282
        %v284 = vsel %vm276, %v283, 0.0
        %285 = vadd.xlane.f32.xlu0 %v284
        %v286 = vpop.xlane.xlu0 %285
        %v287 = vmul.f32 %v286, 0.032258064
        %v288 = vrsqrt.pop %v287
        %v289 = vmul.f32 %v287, %v288
        %vm290 = vcmp.eq.f32.partialorder %v287, inf
        %v291 = vsel %vm290, %v287, %v289
        %vm292 = vcmp.eq.f32.partialorder %v287, 0.0
        %v293 = vand.u32 %v287, 2147483648
        %v294 = vsel %vm292, %v293, %v291
        %v295 = vadd.f32 %v294, 1e-06
        %v296 = vrcp.pop %v295
        %v297 = vld [vmem:[%s1] sm:$0x1]
        %v299 = vlaneseq
        %v300 = vshrl.u32 %v299, 7
        %v301 = vsub.s32 0, %v300
        %v302 = vrot.slane %v297, %v301
        %v304 = vmul.f32 %v302, %v296
        %v305 = vmul.f32 %v282, %v304
        %v306 = vld [vmem:[%s2] sm:$0x1]
        %v308 = vlaneseq
        %v309 = vshrl.u32 %v308, 7
        %v310 = vsub.s32 0, %v309
        %v311 = vrot.slane %v306, %v310
        %v313 = vadd.f32 %v305, %v311
        %v314 = vpack.c.bf16 %v313, %v313
        %v315 = vld [vmem:[%s3] sm:$0xf]
        %v316 = vld [vmem:[%s3 + $0x4] sm:$0xf]
        %v317 = vld [vmem:[%s3 + $0x8] sm:$0xf]
        %v318 = vld [vmem:[%s3 + $0xc] sm:$0xf]
        %v319 = vld [vmem:[%s4] sm:$0x1]
        %v321 = vlaneseq
        %v322 = vshrl.u32 %v321, 7
        %v323 = vsub.s32 0, %v322
        %v324 = vrot.slane %v319, %v323
        %v330 = vunpack.c.l.b16 %v315
        %v331 = vunpack.c.l.b16 %v316
        %v332 = vunpack.c.l.b16 %v317
        %v333 = vunpack.c.l.b16 %v318
        %v334 = vpack.c.b16 %v331, %v330
        %v335 = vpack.c.b16 %v333, %v332
        %v339 = vsel %vm276, %v314, 0
        %341 = vmatprep.subr.bf16.mxu0 0
        %342 = vmatpush1.bf16.msra.mxu0 0
        %343 = vmatprep.subr.bf16.mxu0 0
        %344 = vmatpush1.bf16.msra.mxu0 0
        %345 = vmatprep.subr.bf16.mxu0 0
        %346 = vmatpush1.bf16.msra.mxu0 0
        %347 = vmatprep.subr.bf16.mxu0 0
        %348 = vmatpush1.bf16.msra.mxu0 0
        %349 = vmatprep.subr.bf16.mxu0 0
        %350 = vmatpush1.bf16.msra.mxu0 0
        %351 = vmatprep.subr.bf16.mxu0 0
        %352 = vmatpush1.bf16.msra.mxu0 0
        %353 = vmatprep.subr.bf16.mxu0 0
        %354 = vmatpush1.bf16.msra.mxu0 %v335
        %355 = vmatprep.subr.bf16.mxu0 0
        %356 = vmatpush1.bf16.msra.mxu0 %v334
        %357 = vmatprep.subr.bf16.mxu0 0
        %358 = vmatpush2.bf16.msra.mxu0 0
        %359 = vmatprep.subr.bf16.mxu0 0
        %360 = vmatpush2.bf16.msra.mxu0 0
        %361 = vmatprep.subr.bf16.mxu0 0
        %362 = vmatpush2.bf16.msra.mxu0 0
        %363 = vmatprep.subr.bf16.mxu0 0
        %364 = vmatpush2.bf16.msra.mxu0 0
        %365 = vmatprep.subr.bf16.mxu0 0
        %366 = vmatpush2.bf16.msra.mxu0 0
        %367 = vmatprep.subr.bf16.mxu0 0
        %368 = vmatpush2.bf16.msra.mxu0 0
        %369 = vmatprep.subr.bf16.mxu0 0
        %370 = vmatpush2.bf16.msra.mxu0 0
        %371 = vmatprep.subr.bf16.mxu0 0
        %372 = vmatpush2.bf16.msra.mxu0 0
        %373 = vmatprep.mubr.bf16.mxu0 0
        %374 = vmatmul.mubr.bf16.gmra.mxu0 %v339
        %v375 = vpop.f32.mrf.mxu0
        %v376 = vadd.f32 %v324, %v375
        %v377 = vpop.f32.mrf.mxu0
        %v378 = vpop.f32.mrf.mxu0
        %v379 = vpop.f32.mrf.mxu0
        %380 = vdwg.mxu0
        %v381 = vmax.f32 %v376, 0.0
        %v382 = vpack.c.bf16 %v381, %v381
        %v383 = vld [vmem:[%s5] sm:$0xf]
        %v384 = vld [vmem:[%s5 + $0x4] sm:$0xf]
        %v385 = vld [vmem:[%s5 + $0x8] sm:$0xf]
        %v386 = vld [vmem:[%s5 + $0xc] sm:$0xf]
        %v387 = vld [vmem:[%s5 + $0x10] sm:$0xf]
        %v388 = vld [vmem:[%s5 + $0x14] sm:$0xf]
        %v389 = vld [vmem:[%s5 + $0x18] sm:$0xf]
        %v390 = vld [vmem:[%s5 + $0x1c] sm:$0xf]
        %v391 = vld [vmem:[%s6] sm:$0x1]
        %v393 = vlaneseq
        %v394 = vshrl.u32 %v393, 7
        %v395 = vsub.s32 0, %v394
        %v396 = vrot.slane %v391, %v395
        %v406 = vunpack.c.l.b16 %v383
        %v407 = vunpack.c.l.b16 %v384
        %v408 = vunpack.c.l.b16 %v385
        %v409 = vunpack.c.l.b16 %v386
        %v410 = vunpack.c.l.b16 %v387
        %v411 = vunpack.c.l.b16 %v388
        %v412 = vunpack.c.l.b16 %v389
        %v413 = vunpack.c.l.b16 %v390
        %v414 = vpack.c.b16 %v407, %v406
        %v415 = vpack.c.b16 %v409, %v408
        %v416 = vpack.c.b16 %v411, %v410
        %v417 = vpack.c.b16 %v413, %v412
        %vm422 = vcmask 523264
        %v424 = vsel %vm422, %v382, 0
        %426 = vmatprep.subr.bf16.mxu0 0
        %427 = vmatpush1.bf16.msra.mxu0 0
        %428 = vmatprep.subr.bf16.mxu0 0
        %429 = vmatpush1.bf16.msra.mxu0 0
        %430 = vmatprep.subr.bf16.mxu0 0
        %431 = vmatpush1.bf16.msra.mxu0 0
        %432 = vmatprep.subr.bf16.mxu0 0
        %433 = vmatpush1.bf16.msra.mxu0 0
        %434 = vmatprep.subr.bf16.mxu0 0
        %435 = vmatpush1.bf16.msra.mxu0 %v417
        %436 = vmatprep.subr.bf16.mxu0 0
        %437 = vmatpush1.bf16.msra.mxu0 %v416
        %438 = vmatprep.subr.bf16.mxu0 0
        %439 = vmatpush1.bf16.msra.mxu0 %v415
        %440 = vmatprep.subr.bf16.mxu0 0
        %441 = vmatpush1.bf16.msra.mxu0 %v414
        %442 = vmatprep.subr.bf16.mxu0 0
        %443 = vmatpush2.bf16.msra.mxu0 0
        %444 = vmatprep.subr.bf16.mxu0 0
        %445 = vmatpush2.bf16.msra.mxu0 0
        %446 = vmatprep.subr.bf16.mxu0 0
        %447 = vmatpush2.bf16.msra.mxu0 0
        %448 = vmatprep.subr.bf16.mxu0 0
        %449 = vmatpush2.bf16.msra.mxu0 0
        %450 = vmatprep.subr.bf16.mxu0 0
        %451 = vmatpush2.bf16.msra.mxu0 0
        %452 = vmatprep.subr.bf16.mxu0 0
        %453 = vmatpush2.bf16.msra.mxu0 0
        %454 = vmatprep.subr.bf16.mxu0 0
        %455 = vmatpush2.bf16.msra.mxu0 0
        %456 = vmatprep.subr.bf16.mxu0 0
        %457 = vmatpush2.bf16.msra.mxu0 0
        %458 = vmatprep.mubr.bf16.mxu0 0
        %459 = vmatmul.mubr.bf16.gmra.mxu0 %v424
        %v460 = vpop.f32.mrf.mxu0
        %v461 = vadd.f32 %v396, %v460
        %v462 = vpop.f32.mrf.mxu0
        %v463 = vpop.f32.mrf.mxu0
        %v464 = vpop.f32.mrf.mxu0
        %465 = vdwg.mxu0
        %v466 = vadd.f32 %v275, %v461
        %467 = vst.msk [vmem:[%s269] sm:$0xff] %vm276, %v466
        %s468 = sand.u32 %s181, 1
        %s469 = scalar_lea.sflag [#allocation3], %s468
        %s470 = sand.u32 %s181, 1
        %s471 = smul.addr %s470, 8
        %s472 = scalar_lea.vmem [#allocation2], %s471
        // Predicated region
        $region49: #{tpu_custom_call.1} parent=47 // pred_check
          %p473 = pneg %p191
        $region50: #{tpu_custom_call.1} parent=47 // pred_check_branch
          %475 = sbr.rel (%p473) target = $region52
        $region51: #{tpu_custom_call.1} parent=47 // pred_region
          %s477 = ssub.s32 128, 128
          %478 = vsyncadd %s469, %s477
          %s479 = smul.addr %s21, 128
          %s480 = scalar_lea.hbm %s7, %s479
          %s482 = sshll.u32 %s472, 4
          %s483 = int_to_ptr.vmem [resolvable:$true] %s482
          %485 = dma.vmem_to_hbm [thread:$0]  %s483, 128, %s480, %s469
        $region52: #{tpu_custom_call.1} parent=47 // pred_fallthru
          _
      $region48: #{tpu_custom_call.1} parent=5 // pred_fallthru
        _
      %p486 = scmp.le.s32.totalorder 2, %s16
      // Predicated region
      $region53: #{tpu_custom_call.1} parent=5 // pred_check
        %p487 = pneg %p486
      $region54: #{tpu_custom_call.1} parent=5 // pred_check_branch
        %489 = sbr.rel (%p487) target = $region56
      $region55: #{tpu_custom_call.1} parent=5 // pred_region
        %s490 = ssub.s32 %s16, 2
        // Predicated region
        $region57: #{tpu_custom_call.1} parent=55 // pred_check
          %p491 = pneg %p197
        $region58: #{tpu_custom_call.1} parent=55 // pred_check_branch
          %493 = sbr.rel (%p491) target = $region60
        $region59: #{tpu_custom_call.1} parent=55 // pred_region
          %s494 = sand.u32 %s182, 1
          %s495 = scalar_lea.sflag [#allocation3], %s494
          %s496 = sand.u32 %s182, 1
          %s497 = smul.addr %s496, 8
          %s498 = scalar_lea.vmem [#allocation2], %s497
          %499 = dma.done %s495, 128
        $region60: #{tpu_custom_call.1} parent=55 // pred_fallthru
          _
      $region56: #{tpu_custom_call.1} parent=5 // pred_fallthru
        _
    $region6: #{tpu_custom_call.1} parent=1 // loop_footer
      %s20 = sadd.s32 1, %s16
    $region7: #{tpu_custom_call.1} parent=1 // loop_footer_branch
      %15 = sbr.rel target = $region3
    $region8: #{tpu_custom_call.1} parent=1 // loop_exit
      _
    %500 = vsyncpa [#allocation3], 1
    %s501 = scalar_lea.sflag [#allocation3], 1
    %502 = vsyncpa %s501, 1

</llo_original>
